<compile_context>
chip_gen: v7x
topology: tpu7x:2x2x1
jax: 0.10.0
libtpu: 0.0.40
codegen_flags: <defaults>
</compile_context>

<pallas_src>
import functools

import jax
import jax.numpy as jnp
from jax.experimental import pallas as pl
from jax.experimental.pallas import tpu as pltpu


def _round_up(x, m):
    return ((x + m - 1) // m) * m


def _dynamics_kernel(obs_ref, act_ref, w1o_ref, w1a_ref, b1_ref,
                     w2_ref, b2_ref, w3_ref, b3_ref, o_ref):
    # fc1 split into obs-part and act-part (fused concat); bf16 operands with
    # f32 accumulation on the MXU; bias-add / relu on the VPU in f32.
    h1 = (jnp.dot(obs_ref[...], w1o_ref[...], preferred_element_type=jnp.float32)
          + jnp.dot(act_ref[...], w1a_ref[...], preferred_element_type=jnp.float32)
          + b1_ref[...])
    h1 = jnp.maximum(h1, 0.0).astype(jnp.bfloat16)

    h2 = jnp.dot(h1, w2_ref[...], preferred_element_type=jnp.float32) + b2_ref[...]
    h2 = jnp.maximum(h2, 0.0).astype(jnp.bfloat16)

    y = jnp.dot(h2, w3_ref[...], preferred_element_type=jnp.float32) + b3_ref[...]
    o_ref[...] = y.astype(o_ref.dtype)


@functools.partial(jax.jit, static_argnames=("block_b",))
def dynamics_predict(obs, act, params, block_b=512):
    """Equivalent of Dynamics.predict(obs, act).

    obs: (B, state_dim) f32, act: (B, act_dim) f32 -> (B, state_dim) f32.
    Weights are stored transposed vs. PyTorch, i.e. (in_dim, out_dim);
    biases as (1, out_dim).
    """
    w1, b1, w2, b2, w3, b3 = params
    B, state_dim = obs.shape
    _, act_dim = act.shape
    d_in = state_dim + act_dim
    h1 = w1.shape[1]
    h2 = w2.shape[1]
    d_out = w3.shape[1]

    # ---- tile / padding geometry -------------------------------------------
    block_b = max(8, _round_up(block_b, 8))
    bb = min(block_b, _round_up(B, 8))          # don't over-pad tiny batches
    B_pad = _round_up(B, bb)                    # works for any caller batch size
    d_out_pad = _round_up(d_out, 128)           # lane-dense output stores

    # ---- operands: bf16 matmul inputs, f32 biases ---------------------------
    obs_p = jnp.zeros((B_pad, state_dim), jnp.bfloat16).at[:B].set(
        obs.astype(jnp.bfloat16))
    act_p = jnp.zeros((B_pad, act_dim), jnp.bfloat16).at[:B].set(
        act.astype(jnp.bfloat16))
    w1o = w1[:state_dim].astype(jnp.bfloat16)
    w1a = w1[state_dim:].astype(jnp.bfloat16)
    b1f = b1.astype(jnp.float32)
    w2b = w2.astype(jnp.bfloat16)
    b2f = b2.astype(jnp.float32)
    w3p = jnp.zeros((h2, d_out_pad), jnp.bfloat16).at[:, :d_out].set(
        w3.astype(jnp.bfloat16))
    b3p = jnp.zeros((1, d_out_pad), jnp.float32).at[:, :d_out].set(
        b3.astype(jnp.float32))

    grid = (B_pad // bb,)

    flops = 2 * B_pad * (d_in * h1 + h1 * h2 + h2 * d_out_pad)
    bytes_accessed = (
        obs_p.size * 2 + act_p.size * 2                       # bf16 activations in
        + (w1o.size + w1a.size + w2b.size + w3p.size) * 2     # bf16 weights
        + (b1f.size + b2f.size + b3p.size) * 4                # f32 biases
        + B_pad * d_out_pad * 4)                              # f32 output

    out = pl.pallas_call(
        _dynamics_kernel,
        out_shape=jax.ShapeDtypeStruct((B_pad, d_out_pad), jnp.float32),
        grid_spec=pltpu.PrefetchScalarGridSpec(
            num_scalar_prefetch=0,
            grid=grid,
            in_specs=[
                pl.BlockSpec((bb, state_dim), lambda i: (i, 0)),    # obs tile
                pl.BlockSpec((bb, act_dim), lambda i: (i, 0)),      # act tile
                pl.BlockSpec((state_dim, h1), lambda i: (0, 0)),    # w1[:state_dim]
                pl.BlockSpec((act_dim, h1), lambda i: (0, 0)),      # w1[state_dim:]
                pl.BlockSpec((1, h1), lambda i: (0, 0)),            # b1
                pl.BlockSpec((h1, h2), lambda i: (0, 0)),           # w2
                pl.BlockSpec((1, h2), lambda i: (0, 0)),            # b2
                pl.BlockSpec((h2, d_out_pad), lambda i: (0, 0)),    # w3 (lane-padded)
                pl.BlockSpec((1, d_out_pad), lambda i: (0, 0)),     # b3 (lane-padded)
            ],
            out_specs=pl.BlockSpec((bb, d_out_pad), lambda i: (i, 0)),
        ),
        compiler_params=pltpu.CompilerParams(
            dimension_semantics=("parallel",),   # batch tiles shard across cores
        ),
        cost_estimate=pl.CostEstimate(
            flops=flops, transcendentals=0, bytes_accessed=bytes_accessed),
    )(obs_p, act_p, w1o, w1a, b1f, w2b, b2f, w3p, b3p)

    return out[:B, :d_out]


def init_dynamics_params(key, state_dim, act_dim, model_size=(256, 256)):
    """nn.Linear-style init (uniform +/- 1/sqrt(fan_in)); weights (in_dim, out_dim)."""
    d_in = state_dim + act_dim
    dims = [(d_in, model_size[0]), (model_size[0], model_size[1]),
            (model_size[1], state_dim)]
    params = []
    for (fan_in, fan_out) in dims:
        key, kw, kb = jax.random.split(key, 3)
        bound = 1.0 / jnp.sqrt(jnp.float32(fan_in))
        w = jax.random.uniform(kw, (fan_in, fan_out), jnp.float32, -bound, bound)
        b = jax.random.uniform(kb, (1, fan_out), jnp.float32, -bound, bound)
        params.extend([w, b])
    return tuple(params)


def _reference_predict(obs, act, params):
    # Pure-JAX reference with the same bf16 operand rounding the kernel uses
    # (f32 accumulation), so the comparison isolates kernel correctness.
    w1, b1, w2, b2, w3, b3 = params
    bf = lambda a: a.astype(jnp.bfloat16).astype(jnp.float32)
    hi = jax.lax.Precision.HIGHEST
    x = jnp.concatenate([bf(obs), bf(act)], axis=1)
    h1 = jnp.maximum(jnp.dot(x, bf(w1), precision=hi) + b1, 0.0)
    h2 = jnp.maximum(jnp.dot(bf(h1), bf(w2), precision=hi) + b2, 0.0)
    return jnp.dot(bf(h2), bf(w3), precision=hi) + b3


if __name__ == "__main__":
    state_dim, act_dim = 16, 8
    model_size = (256, 256)

    key = jax.random.PRNGKey(0)
    key, k_obs, k_act = jax.random.split(key, 3)
    params = init_dynamics_params(key, state_dim, act_dim, model_size=model_size)

    # Case 1: small, 8-aligned batch.
    batch = 8
    obs = jax.random.normal(k_obs, (batch, state_dim), jnp.float32)
    act = jax.random.normal(k_act, (batch, act_dim), jnp.float32)
    out = jax.block_until_ready(dynamics_predict(obs, act, params))
    ref = _reference_predict(obs, act, params)
    assert out.shape == (batch, state_dim)
    assert jnp.allclose(out, ref, atol=1e-2, rtol=1e-2)

    # Case 2: ragged tiny batch (exercises batch padding + output slicing).
    batch2 = 5
    key, k_obs2, k_act2 = jax.random.split(key, 3)
    obs2 = jax.random.normal(k_obs2, (batch2, state_dim), jnp.float32)
    act2 = jax.random.normal(k_act2, (batch2, act_dim), jnp.float32)
    out2 = jax.block_until_ready(dynamics_predict(obs2, act2, params))
    ref2 = _reference_predict(obs2, act2, params)
    assert out2.shape == (batch2, state_dim)
    assert jnp.allclose(out2, ref2, atol=1e-2, rtol=1e-2)

    # Case 3: multi-tile ragged batch (exercises grid pipelining across tiles).
    batch3 = 1030
    key, k_obs3, k_act3 = jax.random.split(key, 3)
    obs3 = jax.random.normal(k_obs3, (batch3, state_dim), jnp.float32)
    act3 = jax.random.normal(k_act3, (batch3, act_dim), jnp.float32)
    out3 = jax.block_until_ready(dynamics_predict(obs3, act3, params, block_b=512))
    ref3 = _reference_predict(obs3, act3, params)
    assert out3.shape == (batch3, state_dim)
    assert jnp.allclose(out3, ref3, atol=1e-2, rtol=1e-2)

    print("KERNEL_OK")
</pallas_src>

<mosaic_0001>
module attributes {stable_mosaic.version = 11 : i64} {
  func.func @_dynamics_kernel(%arg0: i32, %arg1: memref<8x16xbf16, #tpu.memory_space<vmem>>, %arg2: memref<8x8xbf16, #tpu.memory_space<vmem>>, %arg3: memref<16x256xbf16, #tpu.memory_space<vmem>>, %arg4: memref<8x256xbf16, #tpu.memory_space<vmem>>, %arg5: memref<1x256xf32, #tpu.memory_space<vmem>>, %arg6: memref<256x256xbf16, #tpu.memory_space<vmem>>, %arg7: memref<1x256xf32, #tpu.memory_space<vmem>>, %arg8: memref<256x128xbf16, #tpu.memory_space<vmem>>, %arg9: memref<1x128xf32, #tpu.memory_space<vmem>>, %arg10: memref<8x128xf32, #tpu.memory_space<vmem>>) attributes {dimension_semantics = [#tpu.dimension_semantics<parallel>], iteration_bounds = array<i64: 1>, scalar_prefetch = 0 : i64, scratch_operands = 0 : i64, tpu.core_type = #tpu.core_type<tc>, window_params = [{transform_indices = @transform_0, window_bounds = array<i64: 8, 16>}, {transform_indices = @transform_1, window_bounds = array<i64: 8, 8>}, {pipeline_mode = #tpu.pipeline_mode<synchronous>, transform_indices = @transform_2, window_bounds = array<i64: 16, 256>}, {pipeline_mode = #tpu.pipeline_mode<synchronous>, transform_indices = @transform_3, window_bounds = array<i64: 8, 256>}, {pipeline_mode = #tpu.pipeline_mode<synchronous>, transform_indices = @transform_4, window_bounds = array<i64: 1, 256>}, {pipeline_mode = #tpu.pipeline_mode<synchronous>, transform_indices = @transform_5, window_bounds = array<i64: 256, 256>}, {pipeline_mode = #tpu.pipeline_mode<synchronous>, transform_indices = @transform_6, window_bounds = array<i64: 1, 256>}, {pipeline_mode = #tpu.pipeline_mode<synchronous>, transform_indices = @transform_7, window_bounds = array<i64: 256, 128>}, {pipeline_mode = #tpu.pipeline_mode<synchronous>, transform_indices = @transform_8, window_bounds = array<i64: 1, 128>}, {transform_indices = @transform_9, window_bounds = array<i64: 8, 128>}]} {
    %c0 = arith.constant 0 : index
    %c0_0 = arith.constant 0 : index
    %0 = vector.load %arg1[%c0, %c0_0] : memref<8x16xbf16, #tpu.memory_space<vmem>>, vector<8x16xbf16>
    %c0_1 = arith.constant 0 : index
    %c0_2 = arith.constant 0 : index
    %1 = vector.load %arg3[%c0_1, %c0_2] : memref<16x256xbf16, #tpu.memory_space<vmem>>, vector<16x256xbf16>
    %cst = arith.constant dense<0.000000e+00> : vector<8x256xf32>
    %2 = tpu.matmul %0, %1, %cst {dimension_numbers = #tpu.dot_dimension_numbers<[1], [0], [0], [1], [0, 0, 1, 1], [], []>} : vector<8x16xbf16>, vector<16x256xbf16>, vector<8x256xf32> -> vector<8x256xf32>
    %c0_3 = arith.constant 0 : index
    %c0_4 = arith.constant 0 : index
    %3 = vector.load %arg2[%c0_3, %c0_4] : memref<8x8xbf16, #tpu.memory_space<vmem>>, vector<8x8xbf16>
    %c0_5 = arith.constant 0 : index
    %c0_6 = arith.constant 0 : index
    %4 = vector.load %arg4[%c0_5, %c0_6] : memref<8x256xbf16, #tpu.memory_space<vmem>>, vector<8x256xbf16>
    %cst_7 = arith.constant dense<0.000000e+00> : vector<8x256xf32>
    %5 = tpu.matmul %3, %4, %cst_7 {dimension_numbers = #tpu.dot_dimension_numbers<[1], [0], [0], [1], [0, 0, 1, 1], [], []>} : vector<8x8xbf16>, vector<8x256xbf16>, vector<8x256xf32> -> vector<8x256xf32>
    %6 = arith.addf %2, %5 : vector<8x256xf32>
    %c0_8 = arith.constant 0 : index
    %c0_9 = arith.constant 0 : index
    %7 = vector.load %arg5[%c0_8, %c0_9] : memref<1x256xf32, #tpu.memory_space<vmem>>, vector<1x256xf32>
    %8 = vector.broadcast %7 : vector<1x256xf32> to vector<8x256xf32>
    %9 = arith.addf %6, %8 : vector<8x256xf32>
    %cst_10 = arith.constant 0.000000e+00 : f32
    %10 = vector.broadcast %cst_10 : f32 to vector<8x256xf32>
    %11 = arith.maximumf %9, %10 : vector<8x256xf32>
    %12 = arith.truncf %11 : vector<8x256xf32> to vector<8x256xbf16>
    %c0_11 = arith.constant 0 : index
    %c0_12 = arith.constant 0 : index
    %13 = vector.load %arg6[%c0_11, %c0_12] : memref<256x256xbf16, #tpu.memory_space<vmem>>, vector<256x256xbf16>
    %cst_13 = arith.constant dense<0.000000e+00> : vector<8x256xf32>
    %14 = tpu.matmul %12, %13, %cst_13 {dimension_numbers = #tpu.dot_dimension_numbers<[1], [0], [0], [1], [0, 0, 1, 1], [], []>} : vector<8x256xbf16>, vector<256x256xbf16>, vector<8x256xf32> -> vector<8x256xf32>
    %c0_14 = arith.constant 0 : index
    %c0_15 = arith.constant 0 : index
    %15 = vector.load %arg7[%c0_14, %c0_15] : memref<1x256xf32, #tpu.memory_space<vmem>>, vector<1x256xf32>
    %16 = vector.broadcast %15 : vector<1x256xf32> to vector<8x256xf32>
    %17 = arith.addf %14, %16 : vector<8x256xf32>
    %cst_16 = arith.constant 0.000000e+00 : f32
    %18 = vector.broadcast %cst_16 : f32 to vector<8x256xf32>
    %19 = arith.maximumf %17, %18 : vector<8x256xf32>
    %20 = arith.truncf %19 : vector<8x256xf32> to vector<8x256xbf16>
    %c0_17 = arith.constant 0 : index
    %c0_18 = arith.constant 0 : index
    %21 = vector.load %arg8[%c0_17, %c0_18] : memref<256x128xbf16, #tpu.memory_space<vmem>>, vector<256x128xbf16>
    %cst_19 = arith.constant dense<0.000000e+00> : vector<8x128xf32>
    %22 = tpu.matmul %20, %21, %cst_19 {dimension_numbers = #tpu.dot_dimension_numbers<[1], [0], [0], [1], [0, 0, 1, 1], [], []>} : vector<8x256xbf16>, vector<256x128xbf16>, vector<8x128xf32> -> vector<8x128xf32>
    %c0_20 = arith.constant 0 : index
    %c0_21 = arith.constant 0 : index
    %23 = vector.load %arg9[%c0_20, %c0_21] : memref<1x128xf32, #tpu.memory_space<vmem>>, vector<1x128xf32>
    %24 = vector.broadcast %23 : vector<1x128xf32> to vector<8x128xf32>
    %25 = arith.addf %22, %24 : vector<8x128xf32>
    %c0_22 = arith.constant 0 : index
    %c0_23 = arith.constant 0 : index
    %26 = vector.load %arg10[%c0_22, %c0_23] : memref<8x128xf32, #tpu.memory_space<vmem>>, vector<8x128xf32>
    tpu.vector_store %arg10[%c0_22, %c0_23], %25 {strides = array<i32>} : memref<8x128xf32, #tpu.memory_space<vmem>>, vector<8x128xf32>,
    return
  }
  func.func @transform_0(%arg0: i32) -> (i32, i32) {
    %c0_i32 = arith.constant 0 : i32
    %c0_i32_0 = arith.constant 0 : i32
    return %arg0, %c0_i32 : i32, i32
  }
  func.func @transform_1(%arg0: i32) -> (i32, i32) {
    %c0_i32 = arith.constant 0 : i32
    %c0_i32_0 = arith.constant 0 : i32
    return %arg0, %c0_i32 : i32, i32
  }
  func.func @transform_2(%arg0: i32) -> (i32, i32) {
    %c0_i32 = arith.constant 0 : i32
    %c0_i32_0 = arith.constant 0 : i32
    %c0_i32_1 = arith.constant 0 : i32
    return %c0_i32, %c0_i32_0 : i32, i32
  }
  func.func @transform_3(%arg0: i32) -> (i32, i32) {
    %c0_i32 = arith.constant 0 : i32
    %c0_i32_0 = arith.constant 0 : i32
    %c0_i32_1 = arith.constant 0 : i32
    return %c0_i32, %c0_i32_0 : i32, i32
  }
  func.func @transform_4(%arg0: i32) -> (i32, i32) {
    %c0_i32 = arith.constant 0 : i32
    %c0_i32_0 = arith.constant 0 : i32
    %c0_i32_1 = arith.constant 0 : i32
    return %c0_i32, %c0_i32_0 : i32, i32
  }
  func.func @transform_5(%arg0: i32) -> (i32, i32) {
    %c0_i32 = arith.constant 0 : i32
    %c0_i32_0 = arith.constant 0 : i32
    %c0_i32_1 = arith.constant 0 : i32
    return %c0_i32, %c0_i32_0 : i32, i32
  }
  func.func @transform_6(%arg0: i32) -> (i32, i32) {
    %c0_i32 = arith.constant 0 : i32
    %c0_i32_0 = arith.constant 0 : i32
    %c0_i32_1 = arith.constant 0 : i32
    return %c0_i32, %c0_i32_0 : i32, i32
  }
  func.func @transform_7(%arg0: i32) -> (i32, i32) {
    %c0_i32 = arith.constant 0 : i32
    %c0_i32_0 = arith.constant 0 : i32
    %c0_i32_1 = arith.constant 0 : i32
    return %c0_i32, %c0_i32_0 : i32, i32
  }
  func.func @transform_8(%arg0: i32) -> (i32, i32) {
    %c0_i32 = arith.constant 0 : i32
    %c0_i32_0 = arith.constant 0 : i32
    %c0_i32_1 = arith.constant 0 : i32
    return %c0_i32, %c0_i32_0 : i32, i32
  }
  func.func @transform_9(%arg0: i32) -> (i32, i32) {
    %c0_i32 = arith.constant 0 : i32
    %c0_i32_0 = arith.constant 0 : i32
    return %arg0, %c0_i32 : i32, i32
  }
}

</mosaic_0001>

<llo_original>
// kernel: dynamics_predict.1
$region0: #{dynamics_predict.1}
  #allocation0 [shape = 'u32[]', space=smem, size = 0x4, offset = 0x4, fixed_abs, tag = 'smem constant byte address 0x4 - core index']
  #allocation1 [shape = 'u32[144,128]{1,0:T(1,128)}', space=vmem, size = 0x12000, scoped, tag = 'internal scratch']
  %s0 = inlined_call_operand.vmem [shape: bf16[8,16], index: 0, kind: input, shape index: {}]
  %s1 = inlined_call_operand.vmem [shape: bf16[8,8], index: 1, kind: input, shape index: {}]
  %s2 = inlined_call_operand.vmem [shape: bf16[16,256], index: 2, kind: input, shape index: {}]
  %s3 = inlined_call_operand.vmem [shape: bf16[8,256], index: 3, kind: input, shape index: {}]
  %s4 = inlined_call_operand.vmem [shape: f32[1,256], index: 4, kind: input, shape index: {}]
  %s5 = inlined_call_operand.vmem [shape: bf16[256,256], index: 5, kind: input, shape index: {}]
  %s6 = inlined_call_operand.vmem [shape: f32[1,256], index: 6, kind: input, shape index: {}]
  %s7 = inlined_call_operand.vmem [shape: bf16[256,128], index: 7, kind: input, shape index: {}]
  %s8 = inlined_call_operand.vmem [shape: f32[1,128], index: 8, kind: input, shape index: {}]
  %s9 = inlined_call_operand.hbm [shape: f32[8,128], index: 9, kind: output, shape index: {}]
  %s10 = sld [smem:[#allocation0]]
  $region46: #{dynamics_predict.1} parent=0
    _
  %s12 = ssub.s32 1, %s10
  %s13 = scalar_select 0, %s12, %s10
  $region1: #{dynamics_predict.1} parent=0
    #allocation2 [shape = 'u8[4096]{0}', space=vmem, size = 0x1000, scoped, tag = 'output window, operand 0, single buffered']
    #allocation3 [shape = 's32[1]{0}', space=sflag, size = 0x4, scoped, tag = 'scoped memory for dynamics_predict.1']
    %14 = vsyncpa [#allocation3], 0
    // Predicated region
    $region2: #{dynamics_predict.1} parent=1 // pred_check
      _
    $region3: #{dynamics_predict.1} parent=1 // pred_check_branch
      %16 = sbr.rel (0) target = $region5
    $region4: #{dynamics_predict.1} parent=1 // pred_region
      _
    $region5: #{dynamics_predict.1} parent=1 // pred_fallthru
      _
    // Predicated region
    $region6: #{dynamics_predict.1} parent=1 // pred_check
      _
    $region7: #{dynamics_predict.1} parent=1 // pred_check_branch
      %18 = sbr.rel (0) target = $region9
    $region8: #{dynamics_predict.1} parent=1 // pred_region
      _
    $region9: #{dynamics_predict.1} parent=1 // pred_fallthru
      _
    // Predicated region
    $region10: #{dynamics_predict.1} parent=1 // pred_check
      _
    $region11: #{dynamics_predict.1} parent=1 // pred_check_branch
      %20 = sbr.rel (0) target = $region13
    $region12: #{dynamics_predict.1} parent=1 // pred_region
      _
    $region13: #{dynamics_predict.1} parent=1 // pred_fallthru
      _
    // Predicated region
    $region14: #{dynamics_predict.1} parent=1 // pred_check
      _
    $region15: #{dynamics_predict.1} parent=1 // pred_check_branch
      %22 = sbr.rel (0) target = $region17
    $region16: #{dynamics_predict.1} parent=1 // pred_region
      _
    $region17: #{dynamics_predict.1} parent=1 // pred_fallthru
      _
    // Predicated region
    $region18: #{dynamics_predict.1} parent=1 // pred_check
      _
    $region19: #{dynamics_predict.1} parent=1 // pred_check_branch
      %24 = sbr.rel (0) target = $region21
    $region20: #{dynamics_predict.1} parent=1 // pred_region
      _
    $region21: #{dynamics_predict.1} parent=1 // pred_fallthru
      _
    // Predicated region
    $region22: #{dynamics_predict.1} parent=1 // pred_check
      _
    $region23: #{dynamics_predict.1} parent=1 // pred_check_branch
      %26 = sbr.rel (0) target = $region25
    $region24: #{dynamics_predict.1} parent=1 // pred_region
      _
    $region25: #{dynamics_predict.1} parent=1 // pred_fallthru
      _
    // Predicated region
    $region26: #{dynamics_predict.1} parent=1 // pred_check
      _
    $region27: #{dynamics_predict.1} parent=1 // pred_check_branch
      %28 = sbr.rel (0) target = $region29
    $region28: #{dynamics_predict.1} parent=1 // pred_region
      _
    $region29: #{dynamics_predict.1} parent=1 // pred_fallthru
      _
    // Predicated region
    $region30: #{dynamics_predict.1} parent=1 // pred_check
      _
    $region31: #{dynamics_predict.1} parent=1 // pred_check_branch
      %30 = sbr.rel (0) target = $region33
    $region32: #{dynamics_predict.1} parent=1 // pred_region
      _
    $region33: #{dynamics_predict.1} parent=1 // pred_fallthru
      _
    // Predicated region
    $region34: #{dynamics_predict.1} parent=1 // pred_check
      _
    $region35: #{dynamics_predict.1} parent=1 // pred_check_branch
      %32 = sbr.rel (0) target = $region37
    $region36: #{dynamics_predict.1} parent=1 // pred_region
      _
    $region37: #{dynamics_predict.1} parent=1 // pred_fallthru
      _
    %v34 = vld [vmem:[%s0] sm:$0xf]
    %v35 = vld [vmem:[%s2] sm:$0xff]
    %v36 = vld [vmem:[%s2 + $0x8] sm:$0xff]
    %v37 = vld [vmem:[%s1] sm:$0xf]
    %v38 = vld [vmem:[%s3] sm:$0xff]
    %v40 = vunpack.c.l.b16 %v38
    %v41 = vunpack.c.h.b16 %v38
    %v42 = vpack.c.b16 %v40, %v40
    %v43 = vpack.c.b16 %v41, %v41
    %vm44 = vcmask 64512
    %v46 = vsel %vm44, %v37, 0
    %vm48 = vcmask 1043456
    %v50 = vsel %vm48, %v42, 0
    %v53 = vsel %vm48, %v43, 0
    %55 = vmatprep.subr.bf16.mxu0 %v53
    %56 = vmatpush1.bf16.msra.mxu0 %v50
    %57 = vmatprep.subr.bf16.mxu0 0
    %58 = vmatpush1.bf16.msra.mxu0 0
    %59 = vmatprep.subr.bf16.mxu0 0
    %60 = vmatpush1.bf16.msra.mxu0 0
    %61 = vmatprep.subr.bf16.mxu0 0
    %62 = vmatpush1.bf16.msra.mxu0 0
    %63 = vmatprep.subr.bf16.mxu0 0
    %64 = vmatpush1.bf16.msra.mxu0 0
    %65 = vmatprep.subr.bf16.mxu0 0
    %66 = vmatpush1.bf16.msra.mxu0 0
    %67 = vmatprep.subr.bf16.mxu0 0
    %68 = vmatpush1.bf16.msra.mxu0 0
    %69 = vmatprep.subr.bf16.mxu0 0
    %70 = vmatpush1.bf16.msra.mxu0 0
    %71 = vmatprep.subr.bf16.mxu0 0
    %72 = vmatpush1.bf16.msra.mxu0 0
    %73 = vmatprep.subr.bf16.mxu0 0
    %74 = vmatpush1.bf16.msra.mxu0 0
    %75 = vmatprep.subr.bf16.mxu0 0
    %76 = vmatpush1.bf16.msra.mxu0 0
    %77 = vmatprep.subr.bf16.mxu0 0
    %78 = vmatpush1.bf16.msra.mxu0 0
    %79 = vmatprep.subr.bf16.mxu0 0
    %80 = vmatpush1.bf16.msra.mxu0 0
    %81 = vmatprep.subr.bf16.mxu0 0
    %82 = vmatpush1.bf16.msra.mxu0 0
    %83 = vmatprep.subr.bf16.mxu0 0
    %84 = vmatpush1.bf16.msra.mxu0 0
    %85 = vmatprep.subr.bf16.mxu0 0
    %86 = vmatpush1.bf16.msra.mxu0 0
    %87 = vmatprep.mubr.bf16.mxu0 0
    %88 = vmatmul.mubr.bf16.gmra.mrb[0].mxu0 %v46
    %v89 = vpop.f32.mrb[0].mxu0
    %v90 = vadd.f32 0.0, %v89
    %v91 = vpop.f32.mrb[0].mxu0
    %v92 = vadd.f32 0.0, %v91
    %v93 = vpop.f32.mrb[0].mxu0
    %v94 = vpop.f32.mrb[0].mxu0
    %95 = vdwg.mxu0
    %v98 = vunpack.c.l.b16 %v35
    %v99 = vunpack.c.h.b16 %v35
    %v100 = vunpack.c.l.b16 %v36
    %v101 = vunpack.c.h.b16 %v36
    %v102 = vpack.c.b16 %v100, %v98
    %v103 = vpack.c.b16 %v101, %v99
    %vm106 = vcmask 130048
    %v108 = vsel %vm106, %v34, 0
    %110 = vmatprep.subr.bf16.mxu0 %v103
    %111 = vmatpush1.bf16.msra.mxu0 %v102
    %112 = vmatprep.subr.bf16.mxu0 0
    %113 = vmatpush1.bf16.msra.mxu0 0
    %114 = vmatprep.subr.bf16.mxu0 0
    %115 = vmatpush1.bf16.msra.mxu0 0
    %116 = vmatprep.subr.bf16.mxu0 0
    %117 = vmatpush1.bf16.msra.mxu0 0
    %118 = vmatprep.subr.bf16.mxu0 0
    %119 = vmatpush1.bf16.msra.mxu0 0
    %120 = vmatprep.subr.bf16.mxu0 0
    %121 = vmatpush1.bf16.msra.mxu0 0
    %122 = vmatprep.subr.bf16.mxu0 0
    %123 = vmatpush1.bf16.msra.mxu0 0
    %124 = vmatprep.subr.bf16.mxu0 0
    %125 = vmatpush1.bf16.msra.mxu0 0
    %126 = vmatprep.subr.bf16.mxu0 0
    %127 = vmatpush1.bf16.msra.mxu0 0
    %128 = vmatprep.subr.bf16.mxu0 0
    %129 = vmatpush1.bf16.msra.mxu0 0
    %130 = vmatprep.subr.bf16.mxu0 0
    %131 = vmatpush1.bf16.msra.mxu0 0
    %132 = vmatprep.subr.bf16.mxu0 0
    %133 = vmatpush1.bf16.msra.mxu0 0
    %134 = vmatprep.subr.bf16.mxu0 0
    %135 = vmatpush1.bf16.msra.mxu0 0
    %136 = vmatprep.subr.bf16.mxu0 0
    %137 = vmatpush1.bf16.msra.mxu0 0
    %138 = vmatprep.subr.bf16.mxu0 0
    %139 = vmatpush1.bf16.msra.mxu0 0
    %140 = vmatprep.subr.bf16.mxu0 0
    %141 = vmatpush1.bf16.msra.mxu0 0
    %142 = vmatprep.mubr.bf16.mxu0 0
    %143 = vmatmul.mubr.bf16.gmra.mrb[0].mxu0 %v108
    %v144 = vpop.f32.mrb[0].mxu0
    %v145 = vadd.f32 %v90, %v144
    %v146 = vpop.f32.mrb[0].mxu0
    %v147 = vadd.f32 %v92, %v146
    %v148 = vpop.f32.mrb[0].mxu0
    %v149 = vpop.f32.mrb[0].mxu0
    %150 = vdwg.mxu0
    %v151 = vld [vmem:[%s4] sm:$0x3]
    %v153 = vlaneseq
    %v154 = vshrl.u32 %v153, 7
    %v155 = vsub.s32 0, %v154
    %v156 = vrot.slane %v151, %v155
    %v157 = vlaneseq
    %v158 = vshrl.u32 %v157, 7
    %v159 = vsub.s32 1, %v158
    %v160 = vrot.slane %v151, %v159
    %v163 = vadd.f32 %v145, %v156
    %v164 = vadd.f32 %v147, %v160
    %v165 = vmax.f32 %v163, 0.0
    %v166 = vmax.f32 %v164, 0.0
    %v167 = vpack.c.bf16 %v165, %v165
    %v168 = vpack.c.bf16 %v166, %v166
    %v169 = vld [vmem:[%s5] sm:$0xff]
    %v170 = vld [vmem:[%s5 + $0x8] sm:$0xff]
    %v171 = vld [vmem:[%s5 + $0x10] sm:$0xff]
    %v172 = vld [vmem:[%s5 + $0x18] sm:$0xff]
    %v173 = vld [vmem:[%s5 + $0x20] sm:$0xff]
    %v174 = vld [vmem:[%s5 + $0x28] sm:$0xff]
    %v175 = vld [vmem:[%s5 + $0x30] sm:$0xff]
    %v176 = vld [vmem:[%s5 + $0x38] sm:$0xff]
    %v177 = vld [vmem:[%s5 + $0x40] sm:$0xff]
    %v178 = vld [vmem:[%s5 + $0x48] sm:$0xff]
    %v179 = vld [vmem:[%s5 + $0x50] sm:$0xff]
    %v180 = vld [vmem:[%s5 + $0x58] sm:$0xff]
    %v181 = vld [vmem:[%s5 + $0x60] sm:$0xff]
    %v182 = vld [vmem:[%s5 + $0x68] sm:$0xff]
    %v183 = vld [vmem:[%s5 + $0x70] sm:$0xff]
    %v184 = vld [vmem:[%s5 + $0x78] sm:$0xff]
    %v185 = vld [vmem:[%s5 + $0x80] sm:$0xff]
    %v186 = vld [vmem:[%s5 + $0x88] sm:$0xff]
    %v187 = vld [vmem:[%s5 + $0x90] sm:$0xff]
    %v188 = vld [vmem:[%s5 + $0x98] sm:$0xff]
    %v189 = vld [vmem:[%s5 + $0xa0] sm:$0xff]
    %v190 = vld [vmem:[%s5 + $0xa8] sm:$0xff]
    %v191 = vld [vmem:[%s5 + $0xb0] sm:$0xff]
    %v192 = vld [vmem:[%s5 + $0xb8] sm:$0xff]
    %v193 = vld [vmem:[%s5 + $0xc0] sm:$0xff]
    %v194 = vld [vmem:[%s5 + $0xc8] sm:$0xff]
    %v195 = vld [vmem:[%s5 + $0xd0] sm:$0xff]
    %v196 = vld [vmem:[%s5 + $0xd8] sm:$0xff]
    %v197 = vld [vmem:[%s5 + $0xe0] sm:$0xff]
    %v198 = vld [vmem:[%s5 + $0xe8] sm:$0xff]
    %v199 = vld [vmem:[%s5 + $0xf0] sm:$0xff]
    %v200 = vld [vmem:[%s5 + $0xf8] sm:$0xff]
    %v201 = vld [vmem:[%s6] sm:$0x3]
    %v203 = vlaneseq
    %v204 = vshrl.u32 %v203, 7
    %v205 = vsub.s32 0, %v204
    %v206 = vrot.slane %v201, %v205
    %v207 = vlaneseq
    %v208 = vshrl.u32 %v207, 7
    %v209 = vsub.s32 1, %v208
    %v210 = vrot.slane %v201, %v209
    %v245 = vunpack.c.l.b16 %v169
    %v246 = vunpack.c.h.b16 %v169
    %v247 = vunpack.c.l.b16 %v170
    %v248 = vunpack.c.h.b16 %v170
    %v249 = vunpack.c.l.b16 %v171
    %v250 = vunpack.c.h.b16 %v171
    %v251 = vunpack.c.l.b16 %v172
    %v252 = vunpack.c.h.b16 %v172
    %v253 = vunpack.c.l.b16 %v173
    %v254 = vunpack.c.h.b16 %v173
    %v255 = vunpack.c.l.b16 %v174
    %v256 = vunpack.c.h.b16 %v174
    %v257 = vunpack.c.l.b16 %v175
    %v258 = vunpack.c.h.b16 %v175
    %v259 = vunpack.c.l.b16 %v176
    %v260 = vunpack.c.h.b16 %v176
    %v261 = vunpack.c.l.b16 %v177
    %v262 = vunpack.c.h.b16 %v177
    %v263 = vunpack.c.l.b16 %v178
    %v264 = vunpack.c.h.b16 %v178
    %v265 = vunpack.c.l.b16 %v179
    %v266 = vunpack.c.h.b16 %v179
    %v267 = vunpack.c.l.b16 %v180
    %v268 = vunpack.c.h.b16 %v180
    %v269 = vunpack.c.l.b16 %v181
    %v270 = vunpack.c.h.b16 %v181
    %v271 = vunpack.c.l.b16 %v182
    %v272 = vunpack.c.h.b16 %v182
    %v273 = vunpack.c.l.b16 %v183
    %v274 = vunpack.c.h.b16 %v183
    %v275 = vunpack.c.l.b16 %v184
    %v276 = vunpack.c.h.b16 %v184
    %v277 = vunpack.c.l.b16 %v185
    %v278 = vunpack.c.h.b16 %v185
    %v279 = vunpack.c.l.b16 %v186
    %v280 = vunpack.c.h.b16 %v186
    %v281 = vunpack.c.l.b16 %v187
    %v282 = vunpack.c.h.b16 %v187
    %v283 = vunpack.c.l.b16 %v188
    %v284 = vunpack.c.h.b16 %v188
    %v285 = vunpack.c.l.b16 %v189
    %v286 = vunpack.c.h.b16 %v189
    %v287 = vunpack.c.l.b16 %v190
    %v288 = vunpack.c.h.b16 %v190
    %v289 = vunpack.c.l.b16 %v191
    %v290 = vunpack.c.h.b16 %v191
    %v291 = vunpack.c.l.b16 %v192
    %v292 = vunpack.c.h.b16 %v192
    %v293 = vunpack.c.l.b16 %v193
    %v294 = vunpack.c.h.b16 %v193
    %v295 = vunpack.c.l.b16 %v194
    %v296 = vunpack.c.h.b16 %v194
    %v297 = vunpack.c.l.b16 %v195
    %v298 = vunpack.c.h.b16 %v195
    %v299 = vunpack.c.l.b16 %v196
    %v300 = vunpack.c.h.b16 %v196
    %v301 = vunpack.c.l.b16 %v197
    %v302 = vunpack.c.h.b16 %v197
    %v303 = vunpack.c.l.b16 %v198
    %v304 = vunpack.c.h.b16 %v198
    %v305 = vunpack.c.l.b16 %v199
    %v306 = vunpack.c.h.b16 %v199
    %v307 = vunpack.c.l.b16 %v200
    %v308 = vunpack.c.h.b16 %v200
    %v309 = vpack.c.b16 %v247, %v245
    %v310 = vpack.c.b16 %v248, %v246
    %v311 = vpack.c.b16 %v251, %v249
    %v312 = vpack.c.b16 %v252, %v250
    %v313 = vpack.c.b16 %v255, %v253
    %v314 = vpack.c.b16 %v256, %v254
    %v315 = vpack.c.b16 %v259, %v257
    %v316 = vpack.c.b16 %v260, %v258
    %v317 = vpack.c.b16 %v263, %v261
    %v318 = vpack.c.b16 %v264, %v262
    %v319 = vpack.c.b16 %v267, %v265
    %v320 = vpack.c.b16 %v268, %v266
    %v321 = vpack.c.b16 %v271, %v269
    %v322 = vpack.c.b16 %v272, %v270
    %v323 = vpack.c.b16 %v275, %v273
    %v324 = vpack.c.b16 %v276, %v274
    %v325 = vpack.c.b16 %v279, %v277
    %v326 = vpack.c.b16 %v280, %v278
    %v327 = vpack.c.b16 %v283, %v281
    %v328 = vpack.c.b16 %v284, %v282
    %v329 = vpack.c.b16 %v287, %v285
    %v330 = vpack.c.b16 %v288, %v286
    %v331 = vpack.c.b16 %v291, %v289
    %v332 = vpack.c.b16 %v292, %v290
    %v333 = vpack.c.b16 %v295, %v293
    %v334 = vpack.c.b16 %v296, %v294
    %v335 = vpack.c.b16 %v299, %v297
    %v336 = vpack.c.b16 %v300, %v298
    %v337 = vpack.c.b16 %v303, %v301
    %v338 = vpack.c.b16 %v304, %v302
    %v339 = vpack.c.b16 %v307, %v305
    %v340 = vpack.c.b16 %v308, %v306
    %373 = vmatprep.subr.bf16.mxu0 %v310
    %374 = vmatpush1.bf16.msra.mxu0 %v309
    %375 = vmatprep.subr.bf16.mxu0 %v312
    %376 = vmatpush1.bf16.msra.mxu0 %v311
    %377 = vmatprep.subr.bf16.mxu0 %v314
    %378 = vmatpush1.bf16.msra.mxu0 %v313
    %379 = vmatprep.subr.bf16.mxu0 %v316
    %380 = vmatpush1.bf16.msra.mxu0 %v315
    %381 = vmatprep.subr.bf16.mxu0 %v318
    %382 = vmatpush1.bf16.msra.mxu0 %v317
    %383 = vmatprep.subr.bf16.mxu0 %v320
    %384 = vmatpush1.bf16.msra.mxu0 %v319
    %385 = vmatprep.subr.bf16.mxu0 %v322
    %386 = vmatpush1.bf16.msra.mxu0 %v321
    %387 = vmatprep.subr.bf16.mxu0 %v324
    %388 = vmatpush1.bf16.msra.mxu0 %v323
    %389 = vmatprep.subr.bf16.mxu0 %v326
    %390 = vmatpush1.bf16.msra.mxu0 %v325
    %391 = vmatprep.subr.bf16.mxu0 %v328
    %392 = vmatpush1.bf16.msra.mxu0 %v327
    %393 = vmatprep.subr.bf16.mxu0 %v330
    %394 = vmatpush1.bf16.msra.mxu0 %v329
    %395 = vmatprep.subr.bf16.mxu0 %v332
    %396 = vmatpush1.bf16.msra.mxu0 %v331
    %397 = vmatprep.subr.bf16.mxu0 %v334
    %398 = vmatpush1.bf16.msra.mxu0 %v333
    %399 = vmatprep.subr.bf16.mxu0 %v336
    %400 = vmatpush1.bf16.msra.mxu0 %v335
    %401 = vmatprep.subr.bf16.mxu0 %v338
    %402 = vmatpush1.bf16.msra.mxu0 %v337
    %403 = vmatprep.subr.bf16.mxu0 %v340
    %404 = vmatpush1.bf16.msra.mxu0 %v339
    %405 = vmatprep.mubr.bf16.mxu0 %v168
    %406 = vmatmul.mubr.bf16.gmra.mrb[0].mxu0 %v167
    %v407 = vpop.f32.mrb[0].mxu0
    %v408 = vadd.f32 %v206, %v407
    %v409 = vpop.f32.mrb[0].mxu0
    %v410 = vadd.f32 %v210, %v409
    %v411 = vpop.f32.mrb[0].mxu0
    %v412 = vpop.f32.mrb[0].mxu0
    %413 = vdwg.mxu0
    %v414 = vmax.f32 %v408, 0.0
    %v415 = vmax.f32 %v410, 0.0
    %v416 = vpack.c.bf16 %v414, %v414
    %v417 = vpack.c.bf16 %v415, %v415
    %v418 = vld [vmem:[%s7] sm:$0xf]
    %v419 = vld [vmem:[%s7 + $0x4] sm:$0xf]
    %v420 = vld [vmem:[%s7 + $0x8] sm:$0xf]
    %v421 = vld [vmem:[%s7 + $0xc] sm:$0xf]
    %v422 = vld [vmem:[%s7 + $0x10] sm:$0xf]
    %v423 = vld [vmem:[%s7 + $0x14] sm:$0xf]
    %v424 = vld [vmem:[%s7 + $0x18] sm:$0xf]
    %v425 = vld [vmem:[%s7 + $0x1c] sm:$0xf]
    %v426 = vld [vmem:[%s7 + $0x20] sm:$0xf]
    %v427 = vld [vmem:[%s7 + $0x24] sm:$0xf]
    %v428 = vld [vmem:[%s7 + $0x28] sm:$0xf]
    %v429 = vld [vmem:[%s7 + $0x2c] sm:$0xf]
    %v430 = vld [vmem:[%s7 + $0x30] sm:$0xf]
    %v431 = vld [vmem:[%s7 + $0x34] sm:$0xf]
    %v432 = vld [vmem:[%s7 + $0x38] sm:$0xf]
    %v433 = vld [vmem:[%s7 + $0x3c] sm:$0xf]
    %v434 = vld [vmem:[%s7 + $0x40] sm:$0xf]
    %v435 = vld [vmem:[%s7 + $0x44] sm:$0xf]
    %v436 = vld [vmem:[%s7 + $0x48] sm:$0xf]
    %v437 = vld [vmem:[%s7 + $0x4c] sm:$0xf]
    %v438 = vld [vmem:[%s7 + $0x50] sm:$0xf]
    %v439 = vld [vmem:[%s7 + $0x54] sm:$0xf]
    %v440 = vld [vmem:[%s7 + $0x58] sm:$0xf]
    %v441 = vld [vmem:[%s7 + $0x5c] sm:$0xf]
    %v442 = vld [vmem:[%s7 + $0x60] sm:$0xf]
    %v443 = vld [vmem:[%s7 + $0x64] sm:$0xf]
    %v444 = vld [vmem:[%s7 + $0x68] sm:$0xf]
    %v445 = vld [vmem:[%s7 + $0x6c] sm:$0xf]
    %v446 = vld [vmem:[%s7 + $0x70] sm:$0xf]
    %v447 = vld [vmem:[%s7 + $0x74] sm:$0xf]
    %v448 = vld [vmem:[%s7 + $0x78] sm:$0xf]
    %v449 = vld [vmem:[%s7 + $0x7c] sm:$0xf]
    %v450 = vld [vmem:[%s8] sm:$0x1]
    %v452 = vlaneseq
    %v453 = vshrl.u32 %v452, 7
    %v454 = vsub.s32 0, %v453
    %v455 = vrot.slane %v450, %v454
    %v489 = vunpack.c.l.b16 %v418
    %v490 = vunpack.c.l.b16 %v419
    %v491 = vunpack.c.l.b16 %v420
    %v492 = vunpack.c.l.b16 %v421
    %v493 = vunpack.c.l.b16 %v422
    %v494 = vunpack.c.l.b16 %v423
    %v495 = vunpack.c.l.b16 %v424
    %v496 = vunpack.c.l.b16 %v425
    %v497 = vunpack.c.l.b16 %v426
    %v498 = vunpack.c.l.b16 %v427
    %v499 = vunpack.c.l.b16 %v428
    %v500 = vunpack.c.l.b16 %v429
    %v501 = vunpack.c.l.b16 %v430
    %v502 = vunpack.c.l.b16 %v431
    %v503 = vunpack.c.l.b16 %v432
    %v504 = vunpack.c.l.b16 %v433
    %v505 = vunpack.c.l.b16 %v434
    %v506 = vunpack.c.l.b16 %v435
    %v507 = vunpack.c.l.b16 %v436
    %v508 = vunpack.c.l.b16 %v437
    %v509 = vunpack.c.l.b16 %v438
    %v510 = vunpack.c.l.b16 %v439
    %v511 = vunpack.c.l.b16 %v440
    %v512 = vunpack.c.l.b16 %v441
    %v513 = vunpack.c.l.b16 %v442
    %v514 = vunpack.c.l.b16 %v443
    %v515 = vunpack.c.l.b16 %v444
    %v516 = vunpack.c.l.b16 %v445
    %v517 = vunpack.c.l.b16 %v446
    %v518 = vunpack.c.l.b16 %v447
    %v519 = vunpack.c.l.b16 %v448
    %v520 = vunpack.c.l.b16 %v449
    %v521 = vpack.c.b16 %v490, %v489
    %v522 = vpack.c.b16 %v492, %v491
    %v523 = vpack.c.b16 %v494, %v493
    %v524 = vpack.c.b16 %v496, %v495
    %v525 = vpack.c.b16 %v498, %v497
    %v526 = vpack.c.b16 %v500, %v499
    %v527 = vpack.c.b16 %v502, %v501
    %v528 = vpack.c.b16 %v504, %v503
    %v529 = vpack.c.b16 %v506, %v505
    %v530 = vpack.c.b16 %v508, %v507
    %v531 = vpack.c.b16 %v510, %v509
    %v532 = vpack.c.b16 %v512, %v511
    %v533 = vpack.c.b16 %v514, %v513
    %v534 = vpack.c.b16 %v516, %v515
    %v535 = vpack.c.b16 %v518, %v517
    %v536 = vpack.c.b16 %v520, %v519
    %553 = vmatprep.subr.bf16.mxu0 0
    %554 = vmatpush1.bf16.msra.mxu0 %v521
    %555 = vmatprep.subr.bf16.mxu0 0
    %556 = vmatpush1.bf16.msra.mxu0 %v522
    %557 = vmatprep.subr.bf16.mxu0 0
    %558 = vmatpush1.bf16.msra.mxu0 %v523
    %559 = vmatprep.subr.bf16.mxu0 0
    %560 = vmatpush1.bf16.msra.mxu0 %v524
    %561 = vmatprep.subr.bf16.mxu0 0
    %562 = vmatpush1.bf16.msra.mxu0 %v525
    %563 = vmatprep.subr.bf16.mxu0 0
    %564 = vmatpush1.bf16.msra.mxu0 %v526
    %565 = vmatprep.subr.bf16.mxu0 0
    %566 = vmatpush1.bf16.msra.mxu0 %v527
    %567 = vmatprep.subr.bf16.mxu0 0
    %568 = vmatpush1.bf16.msra.mxu0 %v528
    %569 = vmatprep.subr.bf16.mxu0 0
    %570 = vmatpush1.bf16.msra.mxu0 %v529
    %571 = vmatprep.subr.bf16.mxu0 0
    %572 = vmatpush1.bf16.msra.mxu0 %v530
    %573 = vmatprep.subr.bf16.mxu0 0
    %574 = vmatpush1.bf16.msra.mxu0 %v531
    %575 = vmatprep.subr.bf16.mxu0 0
    %576 = vmatpush1.bf16.msra.mxu0 %v532
    %577 = vmatprep.subr.bf16.mxu0 0
    %578 = vmatpush1.bf16.msra.mxu0 %v533
    %579 = vmatprep.subr.bf16.mxu0 0
    %580 = vmatpush1.bf16.msra.mxu0 %v534
    %581 = vmatprep.subr.bf16.mxu0 0
    %582 = vmatpush1.bf16.msra.mxu0 %v535
    %583 = vmatprep.subr.bf16.mxu0 0
    %584 = vmatpush1.bf16.msra.mxu0 %v536
    %585 = vmatprep.mubr.bf16.mxu0 %v417
    %586 = vmatmul.mubr.bf16.gmra.mrb[0].mxu0 %v416
    %v587 = vpop.f32.mrb[0].mxu0
    %v588 = vadd.f32 %v455, %v587
    %v589 = vpop.f32.mrb[0].mxu0
    %v590 = vpop.f32.mrb[0].mxu0
    %v591 = vpop.f32.mrb[0].mxu0
    %592 = vdwg.mxu0
    %593 = vst [vmem:[#allocation2] sm:$0xff] %v588
    // Predicated region
    $region38: #{dynamics_predict.1} parent=1 // pred_check
      _
    $region39: #{dynamics_predict.1} parent=1 // pred_check_branch
      %595 = sbr.rel (0) target = $region41
    $region40: #{dynamics_predict.1} parent=1 // pred_region
      %s597 = ssub.s32 128, 128
      %598 = vsyncadd [#allocation3], %s597
      %s600 = sshll.u32 [#allocation2], 4
      %s601 = int_to_ptr.vmem [resolvable:$true] %s600
      %603 = dma.vmem_to_hbm [thread:$0]  %s601, 128, %s9, [#allocation3]
    $region41: #{dynamics_predict.1} parent=1 // pred_fallthru
      _
    // Predicated region
    $region42: #{dynamics_predict.1} parent=1 // pred_check
      _
    $region43: #{dynamics_predict.1} parent=1 // pred_check_branch
      %605 = sbr.rel (0) target = $region45
    $region44: #{dynamics_predict.1} parent=1 // pred_region
      %606 = dma.done [#allocation3], 128
    $region45: #{dynamics_predict.1} parent=1 // pred_fallthru
      _
    %607 = vsyncpa [#allocation3], 1

</llo_original>
